<compile_context>
chip_gen: v6e
topology: v6e:2x2x1
jax: 0.10.0
libtpu: 0.0.40
codegen_flags: <defaults>
</compile_context>

<pallas_src>
import jax
import jax.numpy as jnp
from jax.experimental import pallas as pl
from jax.experimental.pallas import tpu as pltpu


def _round_up(x, m):
    return (x + m - 1) // m * m


def _make_kernel(num_hops, pooling):
    """Kernel for OrderPooling with `num_hops` pooled hop blocks."""

    def kernel(*refs):
        ego_ref = refs[0]                      # (TM, C_pad)         f32
        hop_refs = refs[1:1 + num_hops]        # (TM, K_i, C_pad)    f32
        w_ref, b_ref, o_ref = refs[1 + num_hops:]
        c = ego_ref.shape[-1]                  # padded feature width (mult of 128)

        def pool(x):                           # x: (TM, K, C_pad) f32
            if pooling == "sum":
                return jnp.sum(x, axis=1)
            if pooling == "mean":
                return jnp.sum(x, axis=1) * (1.0 / x.shape[1])
            return jnp.max(x, axis=1)          # "max" (values only)

        # order-0 (ego) block of the concatenated feature @ its weight slice
        acc = jnp.dot(ego_ref[...].astype(jnp.bfloat16),
                      w_ref[0:c, :],
                      preferred_element_type=jnp.float32)
        # order-1..depth pooled blocks: sum of per-block matmuls == concat @ W
        for i, hr in enumerate(hop_refs, start=1):
            p = pool(hr[...].astype(jnp.float32)).astype(jnp.bfloat16)
            acc += jnp.dot(p, w_ref[i * c:(i + 1) * c, :],
                           preferred_element_type=jnp.float32)

        o_ref[...] = (acc + b_ref[...]).astype(o_ref.dtype)

    return kernel


def order_pooling(h, pos_info, w, b, pooling="mean", block_rows=512,
                  vmem_limit_bytes=48 * 1024 * 1024):
    """OrderPooling forward.

    h:        (num_nodes, C) float32 node features.
    pos_info: [idx0 (B,), idx1 (B, K1), ..., idx_depth (B, K_depth)]  int32.
    w:        (C*(depth+1), C) float32  -- nn.Linear weight, stored transposed.
    b:        (C,) float32 bias.
    """
    depth = len(pos_info) - 1
    _, c = h.shape
    c_out = w.shape[1]
    batch = pos_info[0].shape[0]
    b_vec = jnp.reshape(b, (1, -1))

    lane = 128
    c_pad = _round_up(c, lane)
    c_out_pad = _round_up(c_out, lane)

    # Zero-pad the feature dim: zero lanes contribute nothing to pooling or matmul.
    h_pad = jnp.pad(h, ((0, 0), (0, c_pad - c)))

    # --- data-dependent gathers (done with XLA gather in the wrapper) ---
    # TODO(synk): the h[idx] gathers stay outside the kernel; doing them
    # in-kernel would need per-row manual DMA via scalar prefetch.
    ego = h_pad[pos_info[0]]                                          # (B, C_pad)
    hops = []
    for i in range(1, depth + 1):
        idx = pos_info[i]
        k_i = idx.shape[1]
        hops.append(h_pad[idx.reshape(-1)].reshape(batch, k_i, c_pad))

    # --- batch tiling: large tiles (sweepable), padded to a multiple of TM ---
    tm = min(block_rows, _round_up(batch, 8))
    b_pad_rows = _round_up(batch, tm)
    pad_b = b_pad_rows - batch
    ego = jnp.pad(ego, ((0, pad_b), (0, 0)))
    hops = [jnp.pad(hp, ((0, pad_b), (0, 0), (0, 0))) for hp in hops]

    # --- padded, lane-dense classifier params; weights in bf16 for the MXU ---
    w_pad = jnp.zeros(((depth + 1) * c_pad, c_out_pad), jnp.float32)
    for i in range(depth + 1):
        w_pad = w_pad.at[i * c_pad:i * c_pad + c, :c_out].set(
            w[i * c:(i + 1) * c, :])
    w_pad = w_pad.astype(jnp.bfloat16)
    b_pad = jnp.zeros((1, c_out_pad), jnp.float32).at[:, :c_out].set(b_vec)

    grid = (b_pad_rows // tm,)
    in_specs = [pl.BlockSpec((tm, c_pad), lambda i: (i, 0))]
    for hp in hops:
        in_specs.append(pl.BlockSpec((tm, hp.shape[1], c_pad),
                                     lambda i: (i, 0, 0)))
    in_specs.append(pl.BlockSpec(w_pad.shape, lambda i: (0, 0)))   # VMEM-resident
    in_specs.append(pl.BlockSpec(b_pad.shape, lambda i: (0, 0)))   # VMEM-resident

    out = pl.pallas_call(
        _make_kernel(depth, pooling),
        out_shape=jax.ShapeDtypeStruct((b_pad_rows, c_out_pad), jnp.float32),
        grid=grid,
        in_specs=in_specs,
        out_specs=pl.BlockSpec((tm, c_out_pad), lambda i: (i, 0)),
        compiler_params=pltpu.CompilerParams(
            dimension_semantics=("parallel",),        # megacore / v7x dual-TC
            vmem_limit_bytes=vmem_limit_bytes),       # headroom on v7x 64 MiB
    )(ego, *hops, w_pad, b_pad)

    return out[:batch, :c_out]


def order_pooling_ref(h, pos_info, w, b, pooling="mean"):
    """Pure-JAX (f32) reference matching the PyTorch forward."""
    parts = [h[pos_info[0]]]
    for idx in pos_info[1:]:
        g = h[idx.reshape(-1)].reshape(idx.shape[0], idx.shape[1], h.shape[1])
        if pooling == "sum":
            parts.append(g.sum(axis=1))
        elif pooling == "mean":
            parts.append(g.mean(axis=1))
        else:
            parts.append(g.max(axis=1))
    x = jnp.concatenate(parts, axis=1)
    return x @ w + jnp.reshape(b, (1, -1))


if __name__ == "__main__":
    key = jax.random.PRNGKey(0)
    k_h, k_w, k_b, k_p0, k_p1, k_p2 = jax.random.split(key, 6)

    # Small shapes consistent with the module: node features h (N, n_class),
    # pos_info[0] = ego indices, pos_info[i>0] = (B, K_i) neighbor index lists.
    N_NODES, N_CLASS, DEPTH = 64, 8, 2
    BATCH, K1, K2 = 16, 4, 8
    POOLING = "mean"

    h = jax.random.normal(k_h, (N_NODES, N_CLASS), dtype=jnp.float32)
    pos_info = [
        jax.random.randint(k_p0, (BATCH,), 0, N_NODES, dtype=jnp.int32),
        jax.random.randint(k_p1, (BATCH, K1), 0, N_NODES, dtype=jnp.int32),
        jax.random.randint(k_p2, (BATCH, K2), 0, N_NODES, dtype=jnp.int32),
    ]

    d_in = N_CLASS * (DEPTH + 1)
    bound = 1.0 / jnp.sqrt(d_in)
    # stored transposed relative to torch nn.Linear: (in_features, out_features)
    w = jax.random.uniform(k_w, (d_in, N_CLASS), jnp.float32, -bound, bound)
    b = jax.random.uniform(k_b, (N_CLASS,), jnp.float32, -bound, bound)

    out = order_pooling(h, pos_info, w, b, pooling=POOLING)
    out = jax.block_until_ready(out)

    ref = order_pooling_ref(h, pos_info, w, b, POOLING)
    assert out.shape == (BATCH, N_CLASS), out.shape
    # bf16 matmul operands with f32 accumulation -> loosened tolerance vs f32 ref.
    max_err = float(jnp.max(jnp.abs(out - ref)))
    assert jnp.allclose(out, ref, atol=2e-2, rtol=2e-2), max_err

    print("KERNEL_OK")
</pallas_src>

<mosaic_0001>
module attributes {stable_mosaic.version = 11 : i64} {
  func.func @kernel(%arg0: i32, %arg1: memref<16x128xf32, #tpu.memory_space<vmem>>, %arg2: memref<16x4x128xf32, #tpu.memory_space<vmem>>, %arg3: memref<16x8x128xf32, #tpu.memory_space<vmem>>, %arg4: memref<384x128xbf16, #tpu.memory_space<vmem>>, %arg5: memref<1x128xf32, #tpu.memory_space<vmem>>, %arg6: memref<16x128xf32, #tpu.memory_space<vmem>>) attributes {dimension_semantics = [#tpu.dimension_semantics<parallel>], iteration_bounds = array<i64: 1>, scalar_prefetch = 0 : i64, scratch_operands = 0 : i64, tpu.core_type = #tpu.core_type<tc>, window_params = [{transform_indices = @transform_0, window_bounds = array<i64: 16, 128>}, {transform_indices = @transform_1, window_bounds = array<i64: 16, 4, 128>}, {transform_indices = @transform_2, window_bounds = array<i64: 16, 8, 128>}, {pipeline_mode = #tpu.pipeline_mode<synchronous>, transform_indices = @transform_3, window_bounds = array<i64: 384, 128>}, {pipeline_mode = #tpu.pipeline_mode<synchronous>, transform_indices = @transform_4, window_bounds = array<i64: 1, 128>}, {transform_indices = @transform_5, window_bounds = array<i64: 16, 128>}]} {
    %c0 = arith.constant 0 : index
    %c0_0 = arith.constant 0 : index
    %0 = vector.load %arg1[%c0, %c0_0] : memref<16x128xf32, #tpu.memory_space<vmem>>, vector<16x128xf32>
    %1 = arith.truncf %0 : vector<16x128xf32> to vector<16x128xbf16>
    %c0_1 = arith.constant 0 : index
    %c0_2 = arith.constant 0 : index
    %2 = vector.load %arg4[%c0_1, %c0_2] : memref<384x128xbf16, #tpu.memory_space<vmem>>, vector<128x128xbf16>
    %cst = arith.constant dense<0.000000e+00> : vector<16x128xf32>
    %3 = tpu.matmul %1, %2, %cst {dimension_numbers = #tpu.dot_dimension_numbers<[1], [0], [0], [1], [0, 0, 1, 1], [], []>} : vector<16x128xbf16>, vector<128x128xbf16>, vector<16x128xf32> -> vector<16x128xf32>
    %c0_3 = arith.constant 0 : index
    %c0_4 = arith.constant 0 : index
    %c0_5 = arith.constant 0 : index
    %4 = vector.load %arg2[%c0_3, %c0_4, %c0_5] : memref<16x4x128xf32, #tpu.memory_space<vmem>>, vector<16x4x128xf32>
    %cst_6 = arith.constant dense<0.000000e+00> : vector<16x128xf32>
    %5 = vector.multi_reduction <add>, %4, %cst_6 [1] : vector<16x4x128xf32> to vector<16x128xf32>
    %cst_7 = arith.constant 2.500000e-01 : f32
    %6 = vector.broadcast %cst_7 : f32 to vector<16x128xf32>
    %7 = arith.mulf %5, %6 : vector<16x128xf32>
    %8 = arith.truncf %7 : vector<16x128xf32> to vector<16x128xbf16>
    %c128 = arith.constant 128 : index
    %c0_8 = arith.constant 0 : index
    %9 = vector.load %arg4[%c128, %c0_8] : memref<384x128xbf16, #tpu.memory_space<vmem>>, vector<128x128xbf16>
    %cst_9 = arith.constant dense<0.000000e+00> : vector<16x128xf32>
    %10 = tpu.matmul %8, %9, %cst_9 {dimension_numbers = #tpu.dot_dimension_numbers<[1], [0], [0], [1], [0, 0, 1, 1], [], []>} : vector<16x128xbf16>, vector<128x128xbf16>, vector<16x128xf32> -> vector<16x128xf32>
    %11 = arith.addf %3, %10 : vector<16x128xf32>
    %c0_10 = arith.constant 0 : index
    %c0_11 = arith.constant 0 : index
    %c0_12 = arith.constant 0 : index
    %12 = vector.load %arg3[%c0_10, %c0_11, %c0_12] : memref<16x8x128xf32, #tpu.memory_space<vmem>>, vector<16x8x128xf32>
    %cst_13 = arith.constant dense<0.000000e+00> : vector<16x128xf32>
    %13 = vector.multi_reduction <add>, %12, %cst_13 [1] : vector<16x8x128xf32> to vector<16x128xf32>
    %cst_14 = arith.constant 1.250000e-01 : f32
    %14 = vector.broadcast %cst_14 : f32 to vector<16x128xf32>
    %15 = arith.mulf %13, %14 : vector<16x128xf32>
    %16 = arith.truncf %15 : vector<16x128xf32> to vector<16x128xbf16>
    %c256 = arith.constant 256 : index
    %c0_15 = arith.constant 0 : index
    %17 = vector.load %arg4[%c256, %c0_15] : memref<384x128xbf16, #tpu.memory_space<vmem>>, vector<128x128xbf16>
    %cst_16 = arith.constant dense<0.000000e+00> : vector<16x128xf32>
    %18 = tpu.matmul %16, %17, %cst_16 {dimension_numbers = #tpu.dot_dimension_numbers<[1], [0], [0], [1], [0, 0, 1, 1], [], []>} : vector<16x128xbf16>, vector<128x128xbf16>, vector<16x128xf32> -> vector<16x128xf32>
    %19 = arith.addf %11, %18 : vector<16x128xf32>
    %c0_17 = arith.constant 0 : index
    %c0_18 = arith.constant 0 : index
    %20 = vector.load %arg5[%c0_17, %c0_18] : memref<1x128xf32, #tpu.memory_space<vmem>>, vector<1x128xf32>
    %21 = vector.broadcast %20 : vector<1x128xf32> to vector<16x128xf32>
    %22 = arith.addf %19, %21 : vector<16x128xf32>
    %c0_19 = arith.constant 0 : index
    %c0_20 = arith.constant 0 : index
    %23 = vector.load %arg6[%c0_19, %c0_20] : memref<16x128xf32, #tpu.memory_space<vmem>>, vector<16x128xf32>
    tpu.vector_store %arg6[%c0_19, %c0_20], %22 {strides = array<i32>} : memref<16x128xf32, #tpu.memory_space<vmem>>, vector<16x128xf32>,
    return
  }
  func.func @transform_0(%arg0: i32) -> (i32, i32) {
    %c0_i32 = arith.constant 0 : i32
    %c0_i32_0 = arith.constant 0 : i32
    return %arg0, %c0_i32 : i32, i32
  }
  func.func @transform_1(%arg0: i32) -> (i32, i32, i32) {
    %c0_i32 = arith.constant 0 : i32
    %c0_i32_0 = arith.constant 0 : i32
    %c0_i32_1 = arith.constant 0 : i32
    return %arg0, %c0_i32, %c0_i32_0 : i32, i32, i32
  }
  func.func @transform_2(%arg0: i32) -> (i32, i32, i32) {
    %c0_i32 = arith.constant 0 : i32
    %c0_i32_0 = arith.constant 0 : i32
    %c0_i32_1 = arith.constant 0 : i32
    return %arg0, %c0_i32, %c0_i32_0 : i32, i32, i32
  }
  func.func @transform_3(%arg0: i32) -> (i32, i32) {
    %c0_i32 = arith.constant 0 : i32
    %c0_i32_0 = arith.constant 0 : i32
    %c0_i32_1 = arith.constant 0 : i32
    return %c0_i32, %c0_i32_0 : i32, i32
  }
  func.func @transform_4(%arg0: i32) -> (i32, i32) {
    %c0_i32 = arith.constant 0 : i32
    %c0_i32_0 = arith.constant 0 : i32
    %c0_i32_1 = arith.constant 0 : i32
    return %c0_i32, %c0_i32_0 : i32, i32
  }
  func.func @transform_5(%arg0: i32) -> (i32, i32) {
    %c0_i32 = arith.constant 0 : i32
    %c0_i32_0 = arith.constant 0 : i32
    return %arg0, %c0_i32 : i32, i32
  }
}

</mosaic_0001>

<llo_original>
// kernel: tpu_custom_call.1
$region0: #{tpu_custom_call.1}
  #allocation0 [shape = 'u32[]', space=smem, size = 0x4, offset = 0x4, fixed_abs, tag = 'smem constant byte address 0x4 - core index']
  #allocation1 [shape = 'u32[144,128]{1,0:T(1,128)}', space=vmem, size = 0x12000, scoped, tag = 'internal scratch']
  %s0 = inlined_call_operand.hbm [shape: f32[16,128], index: 0, kind: input, shape index: {}]
  %s1 = inlined_call_operand.hbm [shape: f32[16,4,128], index: 1, kind: input, shape index: {}]
  %s2 = inlined_call_operand.hbm [shape: f32[16,8,128], index: 2, kind: input, shape index: {}]
  %s3 = inlined_call_operand.hbm [shape: bf16[384,128], index: 3, kind: input, shape index: {}]
  %s4 = inlined_call_operand.vmem [shape: f32[1,128], index: 4, kind: input, shape index: {}]
  %s5 = inlined_call_operand.hbm [shape: f32[16,128], index: 5, kind: output, shape index: {}]
  %s6 = sld [smem:[#allocation0]]
  $region46: #{tpu_custom_call.1} parent=0
    _
  %s8 = ssub.s32 1, %s6
  %s9 = scalar_select 0, %s8, %s6
  $region1: #{tpu_custom_call.1} parent=0
    #allocation2 [shape = 'u8[8192]{0}', space=vmem, size = 0x2000, scoped, tag = 'input window, operand 0, single buffered']
    #allocation3 [shape = 's32[1]{0}', space=sflag, size = 0x4, scoped, tag = 'scoped memory for tpu_custom_call.1']
    #allocation4 [shape = 's32[1]{0}', space=sflag, size = 0x4, scoped, tag = 'scoped memory for tpu_custom_call.1']
    #allocation5 [shape = 'u8[32768]{0}', space=vmem, size = 0x8000, scoped, tag = 'input window, operand 1, single buffered']
    #allocation6 [shape = 's32[1]{0}', space=sflag, size = 0x4, scoped, tag = 'scoped memory for tpu_custom_call.1']
    #allocation7 [shape = 'u8[65536]{0}', space=vmem, size = 0x10000, scoped, tag = 'input window, operand 2, single buffered']
    #allocation8 [shape = 'u8[98304]{0}', space=vmem, size = 0x18000, scoped, tag = 'input window, operand 3, single buffered']
    #allocation9 [shape = 's32[1]{0}', space=sflag, size = 0x4, scoped, tag = 'scoped memory for tpu_custom_call.1']
    #allocation10 [shape = 'u8[8192]{0}', space=vmem, size = 0x2000, scoped, tag = 'output window, operand 0, single buffered']
    %10 = vsyncpa [#allocation3], 0
    %11 = vsyncpa [#allocation6], 0
    %12 = vsyncpa [#allocation9], 0
    %13 = vsyncpa [#allocation4], 0
    // Predicated region
    $region2: #{tpu_custom_call.1} parent=1 // pred_check
      _
    $region3: #{tpu_custom_call.1} parent=1 // pred_check_branch
      %15 = sbr.rel (0) target = $region5
    $region4: #{tpu_custom_call.1} parent=1 // pred_region
      %s17 = ssub.s32 256, 256
      %18 = vsyncadd [#allocation3], %s17
      %s19 = sshll.u32 [#allocation2], 4
      %s20 = int_to_ptr.vmem [resolvable:$true] %s19
      %25 = dma.hbm_to_vmem [thread:$0]  %s0, 256, %s20, [#allocation3], 128, 128, 8
    $region5: #{tpu_custom_call.1} parent=1 // pred_fallthru
      _
    // Predicated region
    $region6: #{tpu_custom_call.1} parent=1 // pred_check
      _
    $region7: #{tpu_custom_call.1} parent=1 // pred_check_branch
      %27 = sbr.rel (0) target = $region9
    $region8: #{tpu_custom_call.1} parent=1 // pred_region
      %s29 = ssub.s32 1024, 1024
      %30 = vsyncadd [#allocation6], %s29
      %s31 = sshll.u32 [#allocation5], 4
      %s32 = int_to_ptr.vmem [resolvable:$true] %s31
      %37 = dma.hbm_to_vmem [thread:$0]  %s1, 1024, %s32, [#allocation6], 64, 64, 4
    $region9: #{tpu_custom_call.1} parent=1 // pred_fallthru
      _
    // Predicated region
    $region10: #{tpu_custom_call.1} parent=1 // pred_check
      _
    $region11: #{tpu_custom_call.1} parent=1 // pred_check_branch
      %39 = sbr.rel (0) target = $region13
    $region12: #{tpu_custom_call.1} parent=1 // pred_region
      %s41 = ssub.s32 2048, 2048
      %42 = vsyncadd [#allocation6], %s41
      %s43 = sshll.u32 [#allocation7], 4
      %s44 = int_to_ptr.vmem [resolvable:$true] %s43
      %49 = dma.hbm_to_vmem [thread:$0]  %s2, 2048, %s44, [#allocation6], 128, 128, 8
    $region13: #{tpu_custom_call.1} parent=1 // pred_fallthru
      _
    // Predicated region
    $region14: #{tpu_custom_call.1} parent=1 // pred_check
      _
    $region15: #{tpu_custom_call.1} parent=1 // pred_check_branch
      %51 = sbr.rel (0) target = $region17
    $region16: #{tpu_custom_call.1} parent=1 // pred_region
      %s53 = ssub.s32 3072, 3072
      %54 = vsyncadd [#allocation9], %s53
      %s55 = sshll.u32 [#allocation8], 4
      %s56 = int_to_ptr.vmem [resolvable:$true] %s55
      %61 = dma.hbm_to_vmem [thread:$0]  %s3, 3072, %s56, [#allocation9], 64, 64, 4
    $region17: #{tpu_custom_call.1} parent=1 // pred_fallthru
      _
    // Predicated region
    $region18: #{tpu_custom_call.1} parent=1 // pred_check
      _
    $region19: #{tpu_custom_call.1} parent=1 // pred_check_branch
      %63 = sbr.rel (0) target = $region21
    $region20: #{tpu_custom_call.1} parent=1 // pred_region
      _
    $region21: #{tpu_custom_call.1} parent=1 // pred_fallthru
      _
    // Predicated region
    $region22: #{tpu_custom_call.1} parent=1 // pred_check
      _
    $region23: #{tpu_custom_call.1} parent=1 // pred_check_branch
      %65 = sbr.rel (0) target = $region25
    $region24: #{tpu_custom_call.1} parent=1 // pred_region
      %66 = dma.done [#allocation3], 256
    $region25: #{tpu_custom_call.1} parent=1 // pred_fallthru
      _
    // Predicated region
    $region26: #{tpu_custom_call.1} parent=1 // pred_check
      _
    $region27: #{tpu_custom_call.1} parent=1 // pred_check_branch
      %68 = sbr.rel (0) target = $region29
    $region28: #{tpu_custom_call.1} parent=1 // pred_region
      %69 = dma.done [#allocation6], 1024
    $region29: #{tpu_custom_call.1} parent=1 // pred_fallthru
      _
    // Predicated region
    $region30: #{tpu_custom_call.1} parent=1 // pred_check
      _
    $region31: #{tpu_custom_call.1} parent=1 // pred_check_branch
      %71 = sbr.rel (0) target = $region33
    $region32: #{tpu_custom_call.1} parent=1 // pred_region
      %72 = dma.done [#allocation6], 2048
    $region33: #{tpu_custom_call.1} parent=1 // pred_fallthru
      _
    // Predicated region
    $region34: #{tpu_custom_call.1} parent=1 // pred_check
      _
    $region35: #{tpu_custom_call.1} parent=1 // pred_check_branch
      %74 = sbr.rel (0) target = $region37
    $region36: #{tpu_custom_call.1} parent=1 // pred_region
      %75 = dma.done [#allocation9], 3072
    $region37: #{tpu_custom_call.1} parent=1 // pred_fallthru
      _
    %v77 = vld [vmem:[#allocation2] sm:$0xff]
    %v78 = vld [vmem:[#allocation2 + $0x8] sm:$0xff]
    %v79 = vpack.c.bf16 %v78, %v77
    %v80 = vld [vmem:[#allocation8] sm:$0xf]
    %v81 = vld [vmem:[#allocation8 + $0x4] sm:$0xf]
    %v82 = vld [vmem:[#allocation8 + $0x8] sm:$0xf]
    %v83 = vld [vmem:[#allocation8 + $0xc] sm:$0xf]
    %v84 = vld [vmem:[#allocation8 + $0x10] sm:$0xf]
    %v85 = vld [vmem:[#allocation8 + $0x14] sm:$0xf]
    %v86 = vld [vmem:[#allocation8 + $0x18] sm:$0xf]
    %v87 = vld [vmem:[#allocation8 + $0x1c] sm:$0xf]
    %v88 = vld [vmem:[#allocation8 + $0x20] sm:$0xf]
    %v89 = vld [vmem:[#allocation8 + $0x24] sm:$0xf]
    %v90 = vld [vmem:[#allocation8 + $0x28] sm:$0xf]
    %v91 = vld [vmem:[#allocation8 + $0x2c] sm:$0xf]
    %v92 = vld [vmem:[#allocation8 + $0x30] sm:$0xf]
    %v93 = vld [vmem:[#allocation8 + $0x34] sm:$0xf]
    %v94 = vld [vmem:[#allocation8 + $0x38] sm:$0xf]
    %v95 = vld [vmem:[#allocation8 + $0x3c] sm:$0xf]
    %v96 = vld [vmem:[#allocation5] sm:$0xf]
    %v97 = vld [vmem:[#allocation5 + $0x4] sm:$0xf]
    %v98 = vld [vmem:[#allocation5 + $0x8] sm:$0xf]
    %v99 = vld [vmem:[#allocation5 + $0xc] sm:$0xf]
    %v100 = vld [vmem:[#allocation5 + $0x10] sm:$0xf]
    %v101 = vld [vmem:[#allocation5 + $0x14] sm:$0xf]
    %v102 = vld [vmem:[#allocation5 + $0x18] sm:$0xf]
    %v103 = vld [vmem:[#allocation5 + $0x1c] sm:$0xf]
    %v104 = vld [vmem:[#allocation5 + $0x20] sm:$0xf]
    %v105 = vld [vmem:[#allocation5 + $0x24] sm:$0xf]
    %v106 = vld [vmem:[#allocation5 + $0x28] sm:$0xf]
    %v107 = vld [vmem:[#allocation5 + $0x2c] sm:$0xf]
    %v108 = vld [vmem:[#allocation5 + $0x30] sm:$0xf]
    %v109 = vld [vmem:[#allocation5 + $0x34] sm:$0xf]
    %v110 = vld [vmem:[#allocation5 + $0x38] sm:$0xf]
    %v111 = vld [vmem:[#allocation5 + $0x3c] sm:$0xf]
    %vm112 = vcmask 1043456
    %v113 = vsel %vm112, %v96, 0.0
    %v114 = vrot.slane %v113, 4
    %v115 = vadd.f32 %v113, %v114
    %v116 = vrot.slane %v115, 2
    %v117 = vadd.f32 %v115, %v116
    %v118 = vrot.slane %v117, 1
    %v119 = vadd.f32 %v117, %v118
    %v120 = vsel %vm112, %v97, 0.0
    %v121 = vrot.slane %v120, 4
    %v122 = vadd.f32 %v120, %v121
    %v123 = vrot.slane %v122, 2
    %v124 = vadd.f32 %v122, %v123
    %v125 = vrot.slane %v124, 1
    %v126 = vadd.f32 %v124, %v125
    %v127 = vsel %vm112, %v98, 0.0
    %v128 = vrot.slane %v127, 4
    %v129 = vadd.f32 %v127, %v128
    %v130 = vrot.slane %v129, 2
    %v131 = vadd.f32 %v129, %v130
    %v132 = vrot.slane %v131, 1
    %v133 = vadd.f32 %v131, %v132
    %v134 = vsel %vm112, %v99, 0.0
    %v135 = vrot.slane %v134, 4
    %v136 = vadd.f32 %v134, %v135
    %v137 = vrot.slane %v136, 2
    %v138 = vadd.f32 %v136, %v137
    %v139 = vrot.slane %v138, 1
    %v140 = vadd.f32 %v138, %v139
    %v141 = vsel %vm112, %v100, 0.0
    %v142 = vrot.slane %v141, 4
    %v143 = vadd.f32 %v141, %v142
    %v144 = vrot.slane %v143, 2
    %v145 = vadd.f32 %v143, %v144
    %v146 = vrot.slane %v145, 1
    %v147 = vadd.f32 %v145, %v146
    %v148 = vsel %vm112, %v101, 0.0
    %v149 = vrot.slane %v148, 4
    %v150 = vadd.f32 %v148, %v149
    %v151 = vrot.slane %v150, 2
    %v152 = vadd.f32 %v150, %v151
    %v153 = vrot.slane %v152, 1
    %v154 = vadd.f32 %v152, %v153
    %v155 = vsel %vm112, %v102, 0.0
    %v156 = vrot.slane %v155, 4
    %v157 = vadd.f32 %v155, %v156
    %v158 = vrot.slane %v157, 2
    %v159 = vadd.f32 %v157, %v158
    %v160 = vrot.slane %v159, 1
    %v161 = vadd.f32 %v159, %v160
    %v162 = vsel %vm112, %v103, 0.0
    %v163 = vrot.slane %v162, 4
    %v164 = vadd.f32 %v162, %v163
    %v165 = vrot.slane %v164, 2
    %v166 = vadd.f32 %v164, %v165
    %v167 = vrot.slane %v166, 1
    %v168 = vadd.f32 %v166, %v167
    %v169 = vsel %vm112, %v104, 0.0
    %v170 = vrot.slane %v169, 4
    %v171 = vadd.f32 %v169, %v170
    %v172 = vrot.slane %v171, 2
    %v173 = vadd.f32 %v171, %v172
    %v174 = vrot.slane %v173, 1
    %v175 = vadd.f32 %v173, %v174
    %v176 = vsel %vm112, %v105, 0.0
    %v177 = vrot.slane %v176, 4
    %v178 = vadd.f32 %v176, %v177
    %v179 = vrot.slane %v178, 2
    %v180 = vadd.f32 %v178, %v179
    %v181 = vrot.slane %v180, 1
    %v182 = vadd.f32 %v180, %v181
    %v183 = vsel %vm112, %v106, 0.0
    %v184 = vrot.slane %v183, 4
    %v185 = vadd.f32 %v183, %v184
    %v186 = vrot.slane %v185, 2
    %v187 = vadd.f32 %v185, %v186
    %v188 = vrot.slane %v187, 1
    %v189 = vadd.f32 %v187, %v188
    %v190 = vsel %vm112, %v107, 0.0
    %v191 = vrot.slane %v190, 4
    %v192 = vadd.f32 %v190, %v191
    %v193 = vrot.slane %v192, 2
    %v194 = vadd.f32 %v192, %v193
    %v195 = vrot.slane %v194, 1
    %v196 = vadd.f32 %v194, %v195
    %v197 = vsel %vm112, %v108, 0.0
    %v198 = vrot.slane %v197, 4
    %v199 = vadd.f32 %v197, %v198
    %v200 = vrot.slane %v199, 2
    %v201 = vadd.f32 %v199, %v200
    %v202 = vrot.slane %v201, 1
    %v203 = vadd.f32 %v201, %v202
    %v204 = vsel %vm112, %v109, 0.0
    %v205 = vrot.slane %v204, 4
    %v206 = vadd.f32 %v204, %v205
    %v207 = vrot.slane %v206, 2
    %v208 = vadd.f32 %v206, %v207
    %v209 = vrot.slane %v208, 1
    %v210 = vadd.f32 %v208, %v209
    %v211 = vsel %vm112, %v110, 0.0
    %v212 = vrot.slane %v211, 4
    %v213 = vadd.f32 %v211, %v212
    %v214 = vrot.slane %v213, 2
    %v215 = vadd.f32 %v213, %v214
    %v216 = vrot.slane %v215, 1
    %v217 = vadd.f32 %v215, %v216
    %v218 = vsel %vm112, %v111, 0.0
    %v219 = vrot.slane %v218, 4
    %v220 = vadd.f32 %v218, %v219
    %v221 = vrot.slane %v220, 2
    %v222 = vadd.f32 %v220, %v221
    %v223 = vrot.slane %v222, 1
    %v224 = vadd.f32 %v222, %v223
    %v225 = vmul.f32 %v119, 0.25
    %v226 = vmul.f32 %v126, 0.25
    %v227 = vmul.f32 %v133, 0.25
    %v228 = vmul.f32 %v140, 0.25
    %v229 = vmul.f32 %v147, 0.25
    %v230 = vmul.f32 %v154, 0.25
    %v231 = vmul.f32 %v161, 0.25
    %v232 = vmul.f32 %v168, 0.25
    %v233 = vmul.f32 %v175, 0.25
    %v234 = vmul.f32 %v182, 0.25
    %v235 = vmul.f32 %v189, 0.25
    %v236 = vmul.f32 %v196, 0.25
    %v237 = vmul.f32 %v203, 0.25
    %v238 = vmul.f32 %v210, 0.25
    %v239 = vmul.f32 %v217, 0.25
    %v240 = vmul.f32 %v224, 0.25
    %v241 = vpack.c.bf16 %v225, %v225
    %v242 = vpack.c.bf16 %v226, %v226
    %v243 = vpack.c.bf16 %v227, %v227
    %v244 = vpack.c.bf16 %v228, %v228
    %v245 = vpack.c.bf16 %v229, %v229
    %v246 = vpack.c.bf16 %v230, %v230
    %v247 = vpack.c.bf16 %v231, %v231
    %v248 = vpack.c.bf16 %v232, %v232
    %v249 = vpack.c.bf16 %v233, %v233
    %v250 = vpack.c.bf16 %v234, %v234
    %v251 = vpack.c.bf16 %v235, %v235
    %v252 = vpack.c.bf16 %v236, %v236
    %v253 = vpack.c.bf16 %v237, %v237
    %v254 = vpack.c.bf16 %v238, %v238
    %v255 = vpack.c.bf16 %v239, %v239
    %v256 = vpack.c.bf16 %v240, %v240
    %v257 = vld [vmem:[#allocation8 + $0x40] sm:$0xf]
    %v258 = vld [vmem:[#allocation8 + $0x44] sm:$0xf]
    %v259 = vld [vmem:[#allocation8 + $0x48] sm:$0xf]
    %v260 = vld [vmem:[#allocation8 + $0x4c] sm:$0xf]
    %v261 = vld [vmem:[#allocation8 + $0x50] sm:$0xf]
    %v262 = vld [vmem:[#allocation8 + $0x54] sm:$0xf]
    %v263 = vld [vmem:[#allocation8 + $0x58] sm:$0xf]
    %v264 = vld [vmem:[#allocation8 + $0x5c] sm:$0xf]
    %v265 = vld [vmem:[#allocation8 + $0x60] sm:$0xf]
    %v266 = vld [vmem:[#allocation8 + $0x64] sm:$0xf]
    %v267 = vld [vmem:[#allocation8 + $0x68] sm:$0xf]
    %v268 = vld [vmem:[#allocation8 + $0x6c] sm:$0xf]
    %v269 = vld [vmem:[#allocation8 + $0x70] sm:$0xf]
    %v270 = vld [vmem:[#allocation8 + $0x74] sm:$0xf]
    %v271 = vld [vmem:[#allocation8 + $0x78] sm:$0xf]
    %v272 = vld [vmem:[#allocation8 + $0x7c] sm:$0xf]
    %v289 = vunpack.c.l.b16 %v241
    %v290 = vunpack.c.l.b16 %v242
    %v291 = vunpack.c.l.b16 %v243
    %v292 = vunpack.c.l.b16 %v244
    %v293 = vunpack.c.l.b16 %v245
    %v294 = vunpack.c.l.b16 %v246
    %v295 = vunpack.c.l.b16 %v247
    %v296 = vunpack.c.l.b16 %v248
    %v297 = vunpack.c.l.b16 %v249
    %v298 = vunpack.c.l.b16 %v250
    %v299 = vunpack.c.l.b16 %v251
    %v300 = vunpack.c.l.b16 %v252
    %v301 = vunpack.c.l.b16 %v253
    %v302 = vunpack.c.l.b16 %v254
    %v303 = vunpack.c.l.b16 %v255
    %v304 = vunpack.c.l.b16 %v256
    %vm305 = vcmask 1041409
    %v306 = vsel %vm305, %v290, %v289
    %vm307 = vcmask 1042434
    %v308 = vsel %vm307, %v291, %v306
    %vm309 = vcmask 1043459
    %v310 = vsel %vm309, %v292, %v308
    %vm311 = vcmask 1044484
    %v312 = vsel %vm311, %v293, %v310
    %vm313 = vcmask 1045509
    %v314 = vsel %vm313, %v294, %v312
    %vm315 = vcmask 1046534
    %v316 = vsel %vm315, %v295, %v314
    %vm317 = vcmask 1047559
    %v318 = vsel %vm317, %v296, %v316
    %v319 = vsel %vm305, %v298, %v297
    %v320 = vsel %vm307, %v299, %v319
    %v321 = vsel %vm309, %v300, %v320
    %v322 = vsel %vm311, %v301, %v321
    %v323 = vsel %vm313, %v302, %v322
    %v324 = vsel %vm315, %v303, %v323
    %v325 = vsel %vm317, %v304, %v324
    %v326 = vpack.c.b16 %v325, %v318
    %v344 = vunpack.c.l.b16 %v257
    %v345 = vunpack.c.l.b16 %v258
    %v346 = vunpack.c.l.b16 %v259
    %v347 = vunpack.c.l.b16 %v260
    %v348 = vunpack.c.l.b16 %v261
    %v349 = vunpack.c.l.b16 %v262
    %v350 = vunpack.c.l.b16 %v263
    %v351 = vunpack.c.l.b16 %v264
    %v352 = vunpack.c.l.b16 %v265
    %v353 = vunpack.c.l.b16 %v266
    %v354 = vunpack.c.l.b16 %v267
    %v355 = vunpack.c.l.b16 %v268
    %v356 = vunpack.c.l.b16 %v269
    %v357 = vunpack.c.l.b16 %v270
    %v358 = vunpack.c.l.b16 %v271
    %v359 = vunpack.c.l.b16 %v272
    %v360 = vpack.c.b16 %v345, %v344
    %v361 = vpack.c.b16 %v347, %v346
    %v362 = vpack.c.b16 %v349, %v348
    %v363 = vpack.c.b16 %v351, %v350
    %v364 = vpack.c.b16 %v353, %v352
    %v365 = vpack.c.b16 %v355, %v354
    %v366 = vpack.c.b16 %v357, %v356
    %v367 = vpack.c.b16 %v359, %v358
    %376 = vmatprep.subr.bf16.mxu0 0
    %377 = vmatpush1.bf16.msra.mxu0 %v367
    %378 = vmatprep.subr.bf16.mxu0 0
    %379 = vmatpush1.bf16.msra.mxu0 %v366
    %380 = vmatprep.subr.bf16.mxu0 0
    %381 = vmatpush1.bf16.msra.mxu0 %v365
    %382 = vmatprep.subr.bf16.mxu0 0
    %383 = vmatpush1.bf16.msra.mxu0 %v364
    %384 = vmatprep.subr.bf16.mxu0 0
    %385 = vmatpush1.bf16.msra.mxu0 %v363
    %386 = vmatprep.subr.bf16.mxu0 0
    %387 = vmatpush1.bf16.msra.mxu0 %v362
    %388 = vmatprep.subr.bf16.mxu0 0
    %389 = vmatpush1.bf16.msra.mxu0 %v361
    %390 = vmatprep.subr.bf16.mxu0 0
    %391 = vmatpush1.bf16.msra.mxu0 %v360
    %392 = vmatprep.subr.bf16.mxu0 0
    %393 = vmatpush2.bf16.msra.mxu0 0
    %394 = vmatprep.subr.bf16.mxu0 0
    %395 = vmatpush2.bf16.msra.mxu0 0
    %396 = vmatprep.subr.bf16.mxu0 0
    %397 = vmatpush2.bf16.msra.mxu0 0
    %398 = vmatprep.subr.bf16.mxu0 0
    %399 = vmatpush2.bf16.msra.mxu0 0
    %400 = vmatprep.subr.bf16.mxu0 0
    %401 = vmatpush2.bf16.msra.mxu0 0
    %402 = vmatprep.subr.bf16.mxu0 0
    %403 = vmatpush2.bf16.msra.mxu0 0
    %404 = vmatprep.subr.bf16.mxu0 0
    %405 = vmatpush2.bf16.msra.mxu0 0
    %406 = vmatprep.subr.bf16.mxu0 0
    %407 = vmatpush2.bf16.msra.mxu0 0
    %408 = vmatprep.mubr.bf16.mxu0 0
    %409 = vmatmul.mubr.bf16.gmra.mxu0 %v326
    %v410 = vpop.f32.mrf.mxu0
    %v411 = vadd.f32 0.0, %v410
    %v412 = vpop.f32.mrf.mxu0
    %v413 = vpop.f32.mrf.mxu0
    %v414 = vadd.f32 0.0, %v413
    %v415 = vpop.f32.mrf.mxu0
    %416 = vdwg.mxu0
    %v433 = vunpack.c.l.b16 %v80
    %v434 = vunpack.c.l.b16 %v81
    %v435 = vunpack.c.l.b16 %v82
    %v436 = vunpack.c.l.b16 %v83
    %v437 = vunpack.c.l.b16 %v84
    %v438 = vunpack.c.l.b16 %v85
    %v439 = vunpack.c.l.b16 %v86
    %v440 = vunpack.c.l.b16 %v87
    %v441 = vunpack.c.l.b16 %v88
    %v442 = vunpack.c.l.b16 %v89
    %v443 = vunpack.c.l.b16 %v90
    %v444 = vunpack.c.l.b16 %v91
    %v445 = vunpack.c.l.b16 %v92
    %v446 = vunpack.c.l.b16 %v93
    %v447 = vunpack.c.l.b16 %v94
    %v448 = vunpack.c.l.b16 %v95
    %v449 = vpack.c.b16 %v434, %v433
    %v450 = vpack.c.b16 %v436, %v435
    %v451 = vpack.c.b16 %v438, %v437
    %v452 = vpack.c.b16 %v440, %v439
    %v453 = vpack.c.b16 %v442, %v441
    %v454 = vpack.c.b16 %v444, %v443
    %v455 = vpack.c.b16 %v446, %v445
    %v456 = vpack.c.b16 %v448, %v447
    %465 = vmatprep.subr.bf16.mxu0 0
    %466 = vmatpush1.bf16.msra.mxu0 %v456
    %467 = vmatprep.subr.bf16.mxu0 0
    %468 = vmatpush1.bf16.msra.mxu0 %v455
    %469 = vmatprep.subr.bf16.mxu0 0
    %470 = vmatpush1.bf16.msra.mxu0 %v454
    %471 = vmatprep.subr.bf16.mxu0 0
    %472 = vmatpush1.bf16.msra.mxu0 %v453
    %473 = vmatprep.subr.bf16.mxu0 0
    %474 = vmatpush1.bf16.msra.mxu0 %v452
    %475 = vmatprep.subr.bf16.mxu0 0
    %476 = vmatpush1.bf16.msra.mxu0 %v451
    %477 = vmatprep.subr.bf16.mxu0 0
    %478 = vmatpush1.bf16.msra.mxu0 %v450
    %479 = vmatprep.subr.bf16.mxu0 0
    %480 = vmatpush1.bf16.msra.mxu0 %v449
    %481 = vmatprep.subr.bf16.mxu0 0
    %482 = vmatpush2.bf16.msra.mxu0 0
    %483 = vmatprep.subr.bf16.mxu0 0
    %484 = vmatpush2.bf16.msra.mxu0 0
    %485 = vmatprep.subr.bf16.mxu0 0
    %486 = vmatpush2.bf16.msra.mxu0 0
    %487 = vmatprep.subr.bf16.mxu0 0
    %488 = vmatpush2.bf16.msra.mxu0 0
    %489 = vmatprep.subr.bf16.mxu0 0
    %490 = vmatpush2.bf16.msra.mxu0 0
    %491 = vmatprep.subr.bf16.mxu0 0
    %492 = vmatpush2.bf16.msra.mxu0 0
    %493 = vmatprep.subr.bf16.mxu0 0
    %494 = vmatpush2.bf16.msra.mxu0 0
    %495 = vmatprep.subr.bf16.mxu0 0
    %496 = vmatpush2.bf16.msra.mxu0 0
    %497 = vmatprep.mubr.bf16.mxu0 0
    %498 = vmatmul.mubr.bf16.gmra.mxu0 %v79
    %v499 = vpop.f32.mrf.mxu0
    %v500 = vadd.f32 %v411, %v499
    %v501 = vpop.f32.mrf.mxu0
    %v502 = vpop.f32.mrf.mxu0
    %v503 = vadd.f32 %v414, %v502
    %v504 = vpop.f32.mrf.mxu0
    %505 = vdwg.mxu0
    %v506 = vld [vmem:[#allocation7] sm:$0xff]
    %v507 = vld [vmem:[#allocation7 + $0x8] sm:$0xff]
    %v508 = vld [vmem:[#allocation7 + $0x10] sm:$0xff]
    %v509 = vld [vmem:[#allocation7 + $0x18] sm:$0xff]
    %v510 = vld [vmem:[#allocation7 + $0x20] sm:$0xff]
    %v511 = vld [vmem:[#allocation7 + $0x28] sm:$0xff]
    %v512 = vld [vmem:[#allocation7 + $0x30] sm:$0xff]
    %v513 = vld [vmem:[#allocation7 + $0x38] sm:$0xff]
    %v514 = vld [vmem:[#allocation7 + $0x40] sm:$0xff]
    %v515 = vld [vmem:[#allocation7 + $0x48] sm:$0xff]
    %v516 = vld [vmem:[#allocation7 + $0x50] sm:$0xff]
    %v517 = vld [vmem:[#allocation7 + $0x58] sm:$0xff]
    %v518 = vld [vmem:[#allocation7 + $0x60] sm:$0xff]
    %v519 = vld [vmem:[#allocation7 + $0x68] sm:$0xff]
    %v520 = vld [vmem:[#allocation7 + $0x70] sm:$0xff]
    %v521 = vld [vmem:[#allocation7 + $0x78] sm:$0xff]
    %v522 = vrot.slane %v506, 4
    %v523 = vadd.f32 %v506, %v522
    %v524 = vrot.slane %v523, 2
    %v525 = vadd.f32 %v523, %v524
    %v526 = vrot.slane %v525, 1
    %v527 = vadd.f32 %v525, %v526
    %v528 = vrot.slane %v507, 4
    %v529 = vadd.f32 %v507, %v528
    %v530 = vrot.slane %v529, 2
    %v531 = vadd.f32 %v529, %v530
    %v532 = vrot.slane %v531, 1
    %v533 = vadd.f32 %v531, %v532
    %v534 = vrot.slane %v508, 4
    %v535 = vadd.f32 %v508, %v534
    %v536 = vrot.slane %v535, 2
    %v537 = vadd.f32 %v535, %v536
    %v538 = vrot.slane %v537, 1
    %v539 = vadd.f32 %v537, %v538
    %v540 = vrot.slane %v509, 4
    %v541 = vadd.f32 %v509, %v540
    %v542 = vrot.slane %v541, 2
    %v543 = vadd.f32 %v541, %v542
    %v544 = vrot.slane %v543, 1
    %v545 = vadd.f32 %v543, %v544
    %v546 = vrot.slane %v510, 4
    %v547 = vadd.f32 %v510, %v546
    %v548 = vrot.slane %v547, 2
    %v549 = vadd.f32 %v547, %v548
    %v550 = vrot.slane %v549, 1
    %v551 = vadd.f32 %v549, %v550
    %v552 = vrot.slane %v511, 4
    %v553 = vadd.f32 %v511, %v552
    %v554 = vrot.slane %v553, 2
    %v555 = vadd.f32 %v553, %v554
    %v556 = vrot.slane %v555, 1
    %v557 = vadd.f32 %v555, %v556
    %v558 = vrot.slane %v512, 4
    %v559 = vadd.f32 %v512, %v558
    %v560 = vrot.slane %v559, 2
    %v561 = vadd.f32 %v559, %v560
    %v562 = vrot.slane %v561, 1
    %v563 = vadd.f32 %v561, %v562
    %v564 = vrot.slane %v513, 4
    %v565 = vadd.f32 %v513, %v564
    %v566 = vrot.slane %v565, 2
    %v567 = vadd.f32 %v565, %v566
    %v568 = vrot.slane %v567, 1
    %v569 = vadd.f32 %v567, %v568
    %v570 = vrot.slane %v514, 4
    %v571 = vadd.f32 %v514, %v570
    %v572 = vrot.slane %v571, 2
    %v573 = vadd.f32 %v571, %v572
    %v574 = vrot.slane %v573, 1
    %v575 = vadd.f32 %v573, %v574
    %v576 = vrot.slane %v515, 4
    %v577 = vadd.f32 %v515, %v576
    %v578 = vrot.slane %v577, 2
    %v579 = vadd.f32 %v577, %v578
    %v580 = vrot.slane %v579, 1
    %v581 = vadd.f32 %v579, %v580
    %v582 = vrot.slane %v516, 4
    %v583 = vadd.f32 %v516, %v582
    %v584 = vrot.slane %v583, 2
    %v585 = vadd.f32 %v583, %v584
    %v586 = vrot.slane %v585, 1
    %v587 = vadd.f32 %v585, %v586
    %v588 = vrot.slane %v517, 4
    %v589 = vadd.f32 %v517, %v588
    %v590 = vrot.slane %v589, 2
    %v591 = vadd.f32 %v589, %v590
    %v592 = vrot.slane %v591, 1
    %v593 = vadd.f32 %v591, %v592
    %v594 = vrot.slane %v518, 4
    %v595 = vadd.f32 %v518, %v594
    %v596 = vrot.slane %v595, 2
    %v597 = vadd.f32 %v595, %v596
    %v598 = vrot.slane %v597, 1
    %v599 = vadd.f32 %v597, %v598
    %v600 = vrot.slane %v519, 4
    %v601 = vadd.f32 %v519, %v600
    %v602 = vrot.slane %v601, 2
    %v603 = vadd.f32 %v601, %v602
    %v604 = vrot.slane %v603, 1
    %v605 = vadd.f32 %v603, %v604
    %v606 = vrot.slane %v520, 4
    %v607 = vadd.f32 %v520, %v606
    %v608 = vrot.slane %v607, 2
    %v609 = vadd.f32 %v607, %v608
    %v610 = vrot.slane %v609, 1
    %v611 = vadd.f32 %v609, %v610
    %v612 = vrot.slane %v521, 4
    %v613 = vadd.f32 %v521, %v612
    %v614 = vrot.slane %v613, 2
    %v615 = vadd.f32 %v613, %v614
    %v616 = vrot.slane %v615, 1
    %v617 = vadd.f32 %v615, %v616
    %v618 = vmul.f32 %v527, 0.125
    %v619 = vmul.f32 %v533, 0.125
    %v620 = vmul.f32 %v539, 0.125
    %v621 = vmul.f32 %v545, 0.125
    %v622 = vmul.f32 %v551, 0.125
    %v623 = vmul.f32 %v557, 0.125
    %v624 = vmul.f32 %v563, 0.125
    %v625 = vmul.f32 %v569, 0.125
    %v626 = vmul.f32 %v575, 0.125
    %v627 = vmul.f32 %v581, 0.125
    %v628 = vmul.f32 %v587, 0.125
    %v629 = vmul.f32 %v593, 0.125
    %v630 = vmul.f32 %v599, 0.125
    %v631 = vmul.f32 %v605, 0.125
    %v632 = vmul.f32 %v611, 0.125
    %v633 = vmul.f32 %v617, 0.125
    %v634 = vpack.c.bf16 %v618, %v618
    %v635 = vpack.c.bf16 %v619, %v619
    %v636 = vpack.c.bf16 %v620, %v620
    %v637 = vpack.c.bf16 %v621, %v621
    %v638 = vpack.c.bf16 %v622, %v622
    %v639 = vpack.c.bf16 %v623, %v623
    %v640 = vpack.c.bf16 %v624, %v624
    %v641 = vpack.c.bf16 %v625, %v625
    %v642 = vpack.c.bf16 %v626, %v626
    %v643 = vpack.c.bf16 %v627, %v627
    %v644 = vpack.c.bf16 %v628, %v628
    %v645 = vpack.c.bf16 %v629, %v629
    %v646 = vpack.c.bf16 %v630, %v630
    %v647 = vpack.c.bf16 %v631, %v631
    %v648 = vpack.c.bf16 %v632, %v632
    %v649 = vpack.c.bf16 %v633, %v633
    %v650 = vld [vmem:[#allocation8 + $0x80] sm:$0xf]
    %v651 = vld [vmem:[#allocation8 + $0x84] sm:$0xf]
    %v652 = vld [vmem:[#allocation8 + $0x88] sm:$0xf]
    %v653 = vld [vmem:[#allocation8 + $0x8c] sm:$0xf]
    %v654 = vld [vmem:[#allocation8 + $0x90] sm:$0xf]
    %v655 = vld [vmem:[#allocation8 + $0x94] sm:$0xf]
    %v656 = vld [vmem:[#allocation8 + $0x98] sm:$0xf]
    %v657 = vld [vmem:[#allocation8 + $0x9c] sm:$0xf]
    %v658 = vld [vmem:[#allocation8 + $0xa0] sm:$0xf]
    %v659 = vld [vmem:[#allocation8 + $0xa4] sm:$0xf]
    %v660 = vld [vmem:[#allocation8 + $0xa8] sm:$0xf]
    %v661 = vld [vmem:[#allocation8 + $0xac] sm:$0xf]
    %v662 = vld [vmem:[#allocation8 + $0xb0] sm:$0xf]
    %v663 = vld [vmem:[#allocation8 + $0xb4] sm:$0xf]
    %v664 = vld [vmem:[#allocation8 + $0xb8] sm:$0xf]
    %v665 = vld [vmem:[#allocation8 + $0xbc] sm:$0xf]
    %v682 = vunpack.c.l.b16 %v634
    %v683 = vunpack.c.l.b16 %v635
    %v684 = vunpack.c.l.b16 %v636
    %v685 = vunpack.c.l.b16 %v637
    %v686 = vunpack.c.l.b16 %v638
    %v687 = vunpack.c.l.b16 %v639
    %v688 = vunpack.c.l.b16 %v640
    %v689 = vunpack.c.l.b16 %v641
    %v690 = vunpack.c.l.b16 %v642
    %v691 = vunpack.c.l.b16 %v643
    %v692 = vunpack.c.l.b16 %v644
    %v693 = vunpack.c.l.b16 %v645
    %v694 = vunpack.c.l.b16 %v646
    %v695 = vunpack.c.l.b16 %v647
    %v696 = vunpack.c.l.b16 %v648
    %v697 = vunpack.c.l.b16 %v649
    %v698 = vsel %vm305, %v683, %v682
    %v699 = vsel %vm307, %v684, %v698
    %v700 = vsel %vm309, %v685, %v699
    %v701 = vsel %vm311, %v686, %v700
    %v702 = vsel %vm313, %v687, %v701
    %v703 = vsel %vm315, %v688, %v702
    %v704 = vsel %vm317, %v689, %v703
    %v705 = vsel %vm305, %v691, %v690
    %v706 = vsel %vm307, %v692, %v705
    %v707 = vsel %vm309, %v693, %v706
    %v708 = vsel %vm311, %v694, %v707
    %v709 = vsel %vm313, %v695, %v708
    %v710 = vsel %vm315, %v696, %v709
    %v711 = vsel %vm317, %v697, %v710
    %v712 = vpack.c.b16 %v711, %v704
    %v730 = vunpack.c.l.b16 %v650
    %v731 = vunpack.c.l.b16 %v651
    %v732 = vunpack.c.l.b16 %v652
    %v733 = vunpack.c.l.b16 %v653
    %v734 = vunpack.c.l.b16 %v654
    %v735 = vunpack.c.l.b16 %v655
    %v736 = vunpack.c.l.b16 %v656
    %v737 = vunpack.c.l.b16 %v657
    %v738 = vunpack.c.l.b16 %v658
    %v739 = vunpack.c.l.b16 %v659
    %v740 = vunpack.c.l.b16 %v660
    %v741 = vunpack.c.l.b16 %v661
    %v742 = vunpack.c.l.b16 %v662
    %v743 = vunpack.c.l.b16 %v663
    %v744 = vunpack.c.l.b16 %v664
    %v745 = vunpack.c.l.b16 %v665
    %v746 = vpack.c.b16 %v731, %v730
    %v747 = vpack.c.b16 %v733, %v732
    %v748 = vpack.c.b16 %v735, %v734
    %v749 = vpack.c.b16 %v737, %v736
    %v750 = vpack.c.b16 %v739, %v738
    %v751 = vpack.c.b16 %v741, %v740
    %v752 = vpack.c.b16 %v743, %v742
    %v753 = vpack.c.b16 %v745, %v744
    %762 = vmatprep.subr.bf16.mxu0 0
    %763 = vmatpush1.bf16.msra.mxu0 %v753
    %764 = vmatprep.subr.bf16.mxu0 0
    %765 = vmatpush1.bf16.msra.mxu0 %v752
    %766 = vmatprep.subr.bf16.mxu0 0
    %767 = vmatpush1.bf16.msra.mxu0 %v751
    %768 = vmatprep.subr.bf16.mxu0 0
    %769 = vmatpush1.bf16.msra.mxu0 %v750
    %770 = vmatprep.subr.bf16.mxu0 0
    %771 = vmatpush1.bf16.msra.mxu0 %v749
    %772 = vmatprep.subr.bf16.mxu0 0
    %773 = vmatpush1.bf16.msra.mxu0 %v748
    %774 = vmatprep.subr.bf16.mxu0 0
    %775 = vmatpush1.bf16.msra.mxu0 %v747
    %776 = vmatprep.subr.bf16.mxu0 0
    %777 = vmatpush1.bf16.msra.mxu0 %v746
    %778 = vmatprep.subr.bf16.mxu0 0
    %779 = vmatpush2.bf16.msra.mxu0 0
    %780 = vmatprep.subr.bf16.mxu0 0
    %781 = vmatpush2.bf16.msra.mxu0 0
    %782 = vmatprep.subr.bf16.mxu0 0
    %783 = vmatpush2.bf16.msra.mxu0 0
    %784 = vmatprep.subr.bf16.mxu0 0
    %785 = vmatpush2.bf16.msra.mxu0 0
    %786 = vmatprep.subr.bf16.mxu0 0
    %787 = vmatpush2.bf16.msra.mxu0 0
    %788 = vmatprep.subr.bf16.mxu0 0
    %789 = vmatpush2.bf16.msra.mxu0 0
    %790 = vmatprep.subr.bf16.mxu0 0
    %791 = vmatpush2.bf16.msra.mxu0 0
    %792 = vmatprep.subr.bf16.mxu0 0
    %793 = vmatpush2.bf16.msra.mxu0 0
    %794 = vmatprep.mubr.bf16.mxu0 0
    %795 = vmatmul.mubr.bf16.gmra.mxu0 %v712
    %v796 = vpop.f32.mrf.mxu0
    %v797 = vadd.f32 0.0, %v796
    %v798 = vpop.f32.mrf.mxu0
    %v799 = vpop.f32.mrf.mxu0
    %v800 = vadd.f32 0.0, %v799
    %v801 = vpop.f32.mrf.mxu0
    %802 = vdwg.mxu0
    %v803 = vadd.f32 %v500, %v797
    %v804 = vadd.f32 %v503, %v800
    %v805 = vld [vmem:[%s4] sm:$0x1]
    %v807 = vlaneseq
    %v808 = vshrl.u32 %v807, 7
    %v809 = vsub.s32 0, %v808
    %v810 = vrot.slane %v805, %v809
    %v812 = vadd.f32 %v803, %v810
    %v813 = vadd.f32 %v804, %v810
    %814 = vst [vmem:[#allocation10] sm:$0xff] %v812
    %815 = vst [vmem:[#allocation10 + $0x8] sm:$0xff] %v813
    // Predicated region
    $region38: #{tpu_custom_call.1} parent=1 // pred_check
      _
    $region39: #{tpu_custom_call.1} parent=1 // pred_check_branch
      %817 = sbr.rel (0) target = $region41
    $region40: #{tpu_custom_call.1} parent=1 // pred_region
      %s819 = ssub.s32 256, 256
      %820 = vsyncadd [#allocation4], %s819
      %s821 = sshll.u32 [#allocation10], 4
      %s822 = int_to_ptr.vmem [resolvable:$true] %s821
      %827 = dma.vmem_to_hbm [thread:$0]  %s822, 256, %s5, [#allocation4], 128, 128, 8
    $region41: #{tpu_custom_call.1} parent=1 // pred_fallthru
      _
    // Predicated region
    $region42: #{tpu_custom_call.1} parent=1 // pred_check
      _
    $region43: #{tpu_custom_call.1} parent=1 // pred_check_branch
      %829 = sbr.rel (0) target = $region45
    $region44: #{tpu_custom_call.1} parent=1 // pred_region
      %830 = dma.done [#allocation4], 256
    $region45: #{tpu_custom_call.1} parent=1 // pred_fallthru
      _
    %831 = vsyncpa [#allocation3], 1
    %832 = vsyncpa [#allocation6], 1
    %833 = vsyncpa [#allocation9], 1
    %834 = vsyncpa [#allocation4], 1

</llo_original>
